<compile_context>
chip_gen: v7x
topology: tpu7x:2x2x1
jax: 0.10.0
libtpu: 0.0.40
codegen_flags: <defaults>
</compile_context>

<pallas_src>
import jax
import jax.numpy as jnp
from jax import lax
from jax.experimental import pallas as pl
from jax.experimental.pallas import tpu as pltpu

NUM_LABELS = 2
_LANE = 128
_SUBLANE = 8


def _round_up(x, m):
    return ((x + m - 1) // m) * m


def _device_kind():
    try:
        return jax.devices()[0].device_kind.lower()
    except Exception:
        return ""


def _default_core_splits():
    # Only v7x has 2 TensorCores per chip; elsewhere a core split just serializes
    # and duplicates the epilogue + wrapper combine.
    return 2 if "v7" in _device_kind() else 1


def _default_tile_rows():
    # Bigger tiles amortize the ~0.35us per-grid-step overhead against v7x's
    # 3.2 TB/s HBM; with the tiny accumulators the working set stays a few MiB.
    return 2048 if "v7" in _device_kind() else 1024


def _make_kernel(n_valid, tile_rows, steps_per_split):
    elems_per_block = tile_rows * _LANE
    n_full_blocks = n_valid // elems_per_block   # blocks fully inside the data
    tail = n_valid % elems_per_block             # valid elems in the partial block
    groups = tile_rows // _SUBLANE

    def kernel(x_ref, lab_ref, out_ref, s0_acc, s1_acc, c1_acc):
        step = pl.program_id(1)

        @pl.when(step == 0)
        def _init():
            s0_acc[...] = jnp.zeros_like(s0_acc)
            s1_acc[...] = jnp.zeros_like(s1_acc)
            c1_acc[...] = jnp.zeros_like(c1_acc)

        # Logical (unclamped) block owned by this grid step.  Over-provisioned
        # steps re-read the last real block (clamped index_map) and are fully
        # masked in the partial path below.
        logical_block = pl.program_id(0) * steps_per_split + step

        def accumulate(s0_term, s1_term, c1_term):
            # Per-vreg (pure VPU) partial reduction into (8,128) resident
            # accumulators: no full-tile scratch traffic, no XLU.
            s0_acc[...] += jnp.sum(s0_term.reshape(groups, _SUBLANE, _LANE), axis=0)
            s1_acc[...] += jnp.sum(s1_term.reshape(groups, _SUBLANE, _LANE), axis=0)
            c1_acc[...] += jnp.sum(c1_term.reshape(groups, _SUBLANE, _LANE), axis=0)

        def softplus_of(x):
            # Numerically stable BCE-with-logits core: softplus(x) - x * target.
            return jnp.maximum(x, 0.0) + jnp.log1p(jnp.exp(-jnp.abs(x)))

        @pl.when(logical_block < n_full_blocks)
        def _full_block():
            # Fast path (all but at most one step per split): no mask machinery.
            x = x_ref[...].astype(jnp.float32)
            lab_f = lab_ref[...].astype(jnp.float32)   # labels assumed in {0, 1}
            sp = softplus_of(x)
            accumulate((1.0 - lab_f) * sp, lab_f * (sp - x), lab_f)

        @pl.when(logical_block >= n_full_blocks)
        def _partial_block():
            # Ragged tail and fully-masked over-provisioned steps only.
            limit = jnp.where(logical_block == n_full_blocks,
                              jnp.int32(tail), jnp.int32(0))
            row = lax.broadcasted_iota(jnp.int32, (tile_rows, _LANE), 0)
            lane = lax.broadcasted_iota(jnp.int32, (tile_rows, _LANE), 1)
            valid = (row * _LANE + lane) < limit
            valid_f = valid.astype(jnp.float32)
            x = jnp.where(valid, x_ref[...].astype(jnp.float32), 0.0)  # OOB garbage -> 0
            w1 = lab_ref[...].astype(jnp.float32) * valid_f            # int8 garbage finite
            w0 = valid_f - w1
            sp = softplus_of(x)
            accumulate(w0 * sp, w1 * (sp - x), w1)

        @pl.when(step == pl.num_programs(1) - 1)
        def _finalize():
            # Three single-vreg reductions + one lane-dense (8,128) output write.
            s0 = jnp.sum(s0_acc[...], keepdims=True)   # (1, 1)
            s1 = jnp.sum(s1_acc[...], keepdims=True)
            c1 = jnp.sum(c1_acc[...], keepdims=True)
            lane8 = lax.broadcasted_iota(jnp.int32, (_SUBLANE, _LANE), 1)
            packed = (jnp.where(lane8 == 0, s0, 0.0)
                      + jnp.where(lane8 == 1, s1, 0.0)
                      + jnp.where(lane8 == 2, c1, 0.0))
            out_ref[0] = packed

    return kernel


def balanced_loss(logits, label, *, tile_rows=None, core_splits=None):
    """Matches PyTorch BalancedLoss.forward: sum_i mean(BCE over class-i elems) / 2."""
    # TODO(synk): the PyTorch runtime assert `torch.all(label < NUM_LABELS)` has no
    # in-kernel equivalent here; labels are assumed to be in {0, 1}.
    n = logits.size
    if n == 0:
        return jnp.zeros((), logits.dtype)

    if tile_rows is None:
        tile_rows = _default_tile_rows()
    if core_splits is None:
        core_splits = _default_core_splits()

    x = logits.reshape(-1)                  # free row-major flatten; keep input dtype
    lab = label.reshape(-1)
    if lab.dtype.itemsize != 1:             # ship labels as 1 byte/elem of HBM traffic
        lab = lab.astype(jnp.int8)

    pad = (-n) % _LANE
    if pad:                                 # rare: element count not lane aligned
        x = jnp.pad(x, (0, pad))
        lab = jnp.pad(lab, (0, pad))        # pad values are masked out in-kernel
    rows = (n + pad) // _LANE
    x2 = x.reshape(rows, _LANE)
    lab2 = lab.reshape(rows, _LANE)

    # Tile rows: multiple of 32 sublanes (int8 min tile), shrunk for tiny inputs.
    tile_rows = max(32, min(_round_up(tile_rows, 32), _round_up(rows, 32)))
    num_blocks = -(-rows // tile_rows)
    core_splits = max(1, min(core_splits, num_blocks))
    steps_per_split = -(-num_blocks // core_splits)

    def data_map(c, i):
        # Clamp so over-provisioned (fully masked) steps re-read a real block.
        return (jnp.minimum(c * steps_per_split + i, num_blocks - 1), 0)

    out = pl.pallas_call(
        _make_kernel(n, tile_rows, steps_per_split),
        out_shape=jax.ShapeDtypeStruct((core_splits, _SUBLANE, _LANE), jnp.float32),
        grid=(core_splits, steps_per_split),
        in_specs=[
            pl.BlockSpec((tile_rows, _LANE), data_map),
            pl.BlockSpec((tile_rows, _LANE), data_map),
        ],
        out_specs=pl.BlockSpec((1, _SUBLANE, _LANE), lambda c, i: (c, 0, 0)),
        scratch_shapes=[pltpu.VMEM((_SUBLANE, _LANE), jnp.float32)] * 3,
        compiler_params=pltpu.CompilerParams(
            dimension_semantics=("parallel", "arbitrary"),
            vmem_limit_bytes=32 * 1024 * 1024),   # explicit: safe on v5e's 16 MiB default
    )(x2, lab2)

    # Tiny scalar glue: combine per-core-split partials, then per-class means
    # (skipping empty classes, like the PyTorch `if torch.any(...)` guard).
    s0 = jnp.sum(out[:, 0, 0])
    s1 = jnp.sum(out[:, 0, 1])
    c1 = jnp.sum(out[:, 0, 2])
    c0 = jnp.float32(n) - c1                # class-0 count derived in the wrapper

    loss = (jnp.where(c0 > 0, s0 / jnp.maximum(c0, 1.0), 0.0)
            + jnp.where(c1 > 0, s1 / jnp.maximum(c1, 1.0), 0.0)) / NUM_LABELS
    # Note: cast matches PyTorch (`torch.scalar_tensor(0.0).to(logits)` -> logits dtype).
    return loss.astype(logits.dtype)


def _balanced_loss_ref(logits, label):
    """Pure-JAX reference (mirrors the PyTorch module)."""
    x = logits.reshape(-1).astype(jnp.float32)
    lab = label.reshape(-1).astype(jnp.int32)
    softplus = jnp.maximum(x, 0.0) + jnp.log1p(jnp.exp(-jnp.abs(x)))
    loss = jnp.float32(0.0)
    for i in range(NUM_LABELS):
        m = lab == i
        bce = softplus - x * jnp.float32(i)
        cnt = jnp.sum(m.astype(jnp.float32))
        mean_i = jnp.sum(jnp.where(m, bce, 0.0)) / jnp.maximum(cnt, 1.0)
        loss = loss + jnp.where(cnt > 0, mean_i, 0.0) / NUM_LABELS
    return loss


if __name__ == "__main__":
    key = jax.random.PRNGKey(0)
    k1, k2 = jax.random.split(key)

    # Small dense-prediction-style logits/label pair (NCHW).
    logits = jax.random.normal(k1, (2, 4, 16, 16), dtype=jnp.float32)
    label = jax.random.bernoulli(k2, p=0.3, shape=(2, 4, 16, 16)).astype(jnp.int8)

    out = jax.block_until_ready(balanced_loss(logits, label))
    ref = jax.block_until_ready(_balanced_loss_ref(logits, label))

    assert jnp.allclose(out, ref, atol=1e-5, rtol=1e-5), (out, ref)
    print("KERNEL_OK")
</pallas_src>

<mosaic_0001>
module attributes {stable_mosaic.version = 11 : i64} {
  func.func @kernel(%arg0: i32, %arg1: i32, %arg2: memref<32x128xf32, #tpu.memory_space<vmem>>, %arg3: memref<32x128xi8, #tpu.memory_space<vmem>>, %arg4: memref<1x8x128xf32, #tpu.memory_space<vmem>>, %arg5: memref<8x128xf32, #tpu.memory_space<vmem>>, %arg6: memref<8x128xf32, #tpu.memory_space<vmem>>, %arg7: memref<8x128xf32, #tpu.memory_space<vmem>>) attributes {dimension_semantics = [#tpu.dimension_semantics<parallel>, #tpu.dimension_semantics<arbitrary>], iteration_bounds = array<i64: 1, 1>, scalar_prefetch = 0 : i64, scratch_operands = 3 : i64, tpu.core_type = #tpu.core_type<tc>, window_params = [{transform_indices = @transform_0, window_bounds = array<i64: 32, 128>}, {transform_indices = @transform_1, window_bounds = array<i64: 32, 128>}, {transform_indices = @transform_2, window_bounds = array<i64: 1, 8, 128>}]} {
    %c0_i32 = arith.constant 0 : i32
    %0 = arith.cmpi eq, %arg1, %c0_i32 : i32
    %1 = arith.extui %0 : i1 to i32
    %c0_i32_0 = arith.constant 0 : i32
    %2 = arith.cmpi ne, %1, %c0_i32_0 : i32
    scf.if %2 {
      %cst = arith.constant 0.000000e+00 : f32
      %14 = vector.broadcast %cst : f32 to vector<8x128xf32>
      %c0 = arith.constant 0 : index
      %c0_7 = arith.constant 0 : index
      %15 = vector.load %arg5[%c0, %c0_7] : memref<8x128xf32, #tpu.memory_space<vmem>>, vector<8x128xf32>
      tpu.vector_store %arg5[%c0, %c0_7], %14 {strides = array<i32>} : memref<8x128xf32, #tpu.memory_space<vmem>>, vector<8x128xf32>,
      %cst_8 = arith.constant 0.000000e+00 : f32
      %16 = vector.broadcast %cst_8 : f32 to vector<8x128xf32>
      %c0_9 = arith.constant 0 : index
      %c0_10 = arith.constant 0 : index
      %17 = vector.load %arg6[%c0_9, %c0_10] : memref<8x128xf32, #tpu.memory_space<vmem>>, vector<8x128xf32>
      tpu.vector_store %arg6[%c0_9, %c0_10], %16 {strides = array<i32>} : memref<8x128xf32, #tpu.memory_space<vmem>>, vector<8x128xf32>,
      %cst_11 = arith.constant 0.000000e+00 : f32
      %18 = vector.broadcast %cst_11 : f32 to vector<8x128xf32>
      %c0_12 = arith.constant 0 : index
      %c0_13 = arith.constant 0 : index
      %19 = vector.load %arg7[%c0_12, %c0_13] : memref<8x128xf32, #tpu.memory_space<vmem>>, vector<8x128xf32>
      tpu.vector_store %arg7[%c0_12, %c0_13], %18 {strides = array<i32>} : memref<8x128xf32, #tpu.memory_space<vmem>>, vector<8x128xf32>,
    } else {
    }
    %c1_i32 = arith.constant 1 : i32
    %3 = arith.muli %arg0, %c1_i32 : i32
    %4 = arith.addi %3, %arg1 : i32
    %c0_i32_1 = arith.constant 0 : i32
    %5 = arith.cmpi slt, %4, %c0_i32_1 : i32
    %6 = arith.extui %5 : i1 to i32
    %c0_i32_2 = arith.constant 0 : i32
    %7 = arith.cmpi ne, %6, %c0_i32_2 : i32
    scf.if %7 {
      %c0 = arith.constant 0 : index
      %c0_7 = arith.constant 0 : index
      %14 = vector.load %arg2[%c0, %c0_7] : memref<32x128xf32, #tpu.memory_space<vmem>>, vector<32x128xf32>
      %c0_8 = arith.constant 0 : index
      %c0_9 = arith.constant 0 : index
      %15 = vector.load %arg3[%c0_8, %c0_9] : memref<32x128xi8, #tpu.memory_space<vmem>>, vector<32x128xi8>
      %16 = arith.sitofp %15 : vector<32x128xi8> to vector<32x128xf32>
      %cst = arith.constant 0.000000e+00 : f32
      %17 = vector.broadcast %cst : f32 to vector<32x128xf32>
      %18 = arith.maximumf %14, %17 : vector<32x128xf32>
      %19 = math.absf %14 : vector<32x128xf32>
      %cst_10 = arith.constant 0.000000e+00 : f32
      %20 = vector.broadcast %cst_10 : f32 to vector<32x128xf32>
      %21 = arith.subf %20, %19 : vector<32x128xf32>
      %22 = math.exp %21 : vector<32x128xf32>
      %23 = math.log1p %22 : vector<32x128xf32>
      %24 = arith.addf %18, %23 : vector<32x128xf32>
      %cst_11 = arith.constant 1.000000e+00 : f32
      %25 = vector.broadcast %cst_11 : f32 to vector<32x128xf32>
      %26 = arith.subf %25, %16 : vector<32x128xf32>
      %27 = arith.mulf %26, %24 : vector<32x128xf32>
      %28 = arith.subf %24, %14 : vector<32x128xf32>
      %29 = arith.mulf %16, %28 : vector<32x128xf32>
      %c0_12 = arith.constant 0 : index
      %c0_13 = arith.constant 0 : index
      %30 = vector.load %arg5[%c0_12, %c0_13] : memref<8x128xf32, #tpu.memory_space<vmem>>, vector<8x128xf32>
      %31 = vector.shape_cast %27 : vector<32x128xf32> to vector<4x8x128xf32>
      %cst_14 = arith.constant dense<0.000000e+00> : vector<8x128xf32>
      %32 = vector.multi_reduction <add>, %31, %cst_14 [0] : vector<4x8x128xf32> to vector<8x128xf32>
      %33 = arith.addf %30, %32 : vector<8x128xf32>
      %c0_15 = arith.constant 0 : index
      %c0_16 = arith.constant 0 : index
      %34 = vector.load %arg5[%c0_15, %c0_16] : memref<8x128xf32, #tpu.memory_space<vmem>>, vector<8x128xf32>
      tpu.vector_store %arg5[%c0_15, %c0_16], %33 {strides = array<i32>} : memref<8x128xf32, #tpu.memory_space<vmem>>, vector<8x128xf32>,
      %c0_17 = arith.constant 0 : index
      %c0_18 = arith.constant 0 : index
      %35 = vector.load %arg6[%c0_17, %c0_18] : memref<8x128xf32, #tpu.memory_space<vmem>>, vector<8x128xf32>
      %36 = vector.shape_cast %29 : vector<32x128xf32> to vector<4x8x128xf32>
      %cst_19 = arith.constant dense<0.000000e+00> : vector<8x128xf32>
      %37 = vector.multi_reduction <add>, %36, %cst_19 [0] : vector<4x8x128xf32> to vector<8x128xf32>
      %38 = arith.addf %35, %37 : vector<8x128xf32>
      %c0_20 = arith.constant 0 : index
      %c0_21 = arith.constant 0 : index
      %39 = vector.load %arg6[%c0_20, %c0_21] : memref<8x128xf32, #tpu.memory_space<vmem>>, vector<8x128xf32>
      tpu.vector_store %arg6[%c0_20, %c0_21], %38 {strides = array<i32>} : memref<8x128xf32, #tpu.memory_space<vmem>>, vector<8x128xf32>,
      %c0_22 = arith.constant 0 : index
      %c0_23 = arith.constant 0 : index
      %40 = vector.load %arg7[%c0_22, %c0_23] : memref<8x128xf32, #tpu.memory_space<vmem>>, vector<8x128xf32>
      %41 = vector.shape_cast %16 : vector<32x128xf32> to vector<4x8x128xf32>
      %cst_24 = arith.constant dense<0.000000e+00> : vector<8x128xf32>
      %42 = vector.multi_reduction <add>, %41, %cst_24 [0] : vector<4x8x128xf32> to vector<8x128xf32>
      %43 = arith.addf %40, %42 : vector<8x128xf32>
      %c0_25 = arith.constant 0 : index
      %c0_26 = arith.constant 0 : index
      %44 = vector.load %arg7[%c0_25, %c0_26] : memref<8x128xf32, #tpu.memory_space<vmem>>, vector<8x128xf32>
      tpu.vector_store %arg7[%c0_25, %c0_26], %43 {strides = array<i32>} : memref<8x128xf32, #tpu.memory_space<vmem>>, vector<8x128xf32>,
    } else {
    }
    %c0_i32_3 = arith.constant 0 : i32
    %8 = arith.cmpi sge, %4, %c0_i32_3 : i32
    %9 = arith.extui %8 : i1 to i32
    %c0_i32_4 = arith.constant 0 : i32
    %10 = arith.cmpi ne, %9, %c0_i32_4 : i32
    scf.if %10 {
      %c0_i32_7 = arith.constant 0 : i32
      %14 = arith.cmpi eq, %4, %c0_i32_7 : i32
      %c2048_i32 = arith.constant 2048 : i32
      %c0_i32_8 = arith.constant 0 : i32
      %15 = arith.select %14, %c2048_i32, %c0_i32_8 : i32
      %16 = tpu.iota {dimensions = array<i32: 0>} : vector<32x128xi32>
      %17 = tpu.iota {dimensions = array<i32: 1>} : vector<32x128xi32>
      %c128_i32 = arith.constant 128 : i32
      %18 = vector.broadcast %c128_i32 : i32 to vector<32x128xi32>
      %19 = arith.muli %16, %18 : vector<32x128xi32>
      %20 = arith.addi %19, %17 : vector<32x128xi32>
      %21 = vector.broadcast %15 : i32 to vector<32x128xi32>
      %22 = arith.cmpi slt, %20, %21 : vector<32x128xi32>
      %23 = arith.extui %22 : vector<32x128xi1> to vector<32x128xi32>
      %24 = arith.sitofp %23 : vector<32x128xi32> to vector<32x128xf32>
      %c0 = arith.constant 0 : index
      %c0_9 = arith.constant 0 : index
      %25 = vector.load %arg2[%c0, %c0_9] : memref<32x128xf32, #tpu.memory_space<vmem>>, vector<32x128xf32>
      %cst = arith.constant 0.000000e+00 : f32
      %26 = vector.broadcast %cst : f32 to vector<32x128xf32>
      %27 = arith.select %22, %25, %26 : vector<32x128xi1>, vector<32x128xf32>
      %c0_10 = arith.constant 0 : index
      %c0_11 = arith.constant 0 : index
      %28 = vector.load %arg3[%c0_10, %c0_11] : memref<32x128xi8, #tpu.memory_space<vmem>>, vector<32x128xi8>
      %29 = arith.sitofp %28 : vector<32x128xi8> to vector<32x128xf32>
      %30 = arith.mulf %29, %24 : vector<32x128xf32>
      %31 = arith.subf %24, %30 : vector<32x128xf32>
      %cst_12 = arith.constant 0.000000e+00 : f32
      %32 = vector.broadcast %cst_12 : f32 to vector<32x128xf32>
      %33 = arith.maximumf %27, %32 : vector<32x128xf32>
      %34 = math.absf %27 : vector<32x128xf32>
      %cst_13 = arith.constant 0.000000e+00 : f32
      %35 = vector.broadcast %cst_13 : f32 to vector<32x128xf32>
      %36 = arith.subf %35, %34 : vector<32x128xf32>
      %37 = math.exp %36 : vector<32x128xf32>
      %38 = math.log1p %37 : vector<32x128xf32>
      %39 = arith.addf %33, %38 : vector<32x128xf32>
      %40 = arith.mulf %31, %39 : vector<32x128xf32>
      %41 = arith.subf %39, %27 : vector<32x128xf32>
      %42 = arith.mulf %30, %41 : vector<32x128xf32>
      %c0_14 = arith.constant 0 : index
      %c0_15 = arith.constant 0 : index
      %43 = vector.load %arg5[%c0_14, %c0_15] : memref<8x128xf32, #tpu.memory_space<vmem>>, vector<8x128xf32>
      %44 = vector.shape_cast %40 : vector<32x128xf32> to vector<4x8x128xf32>
      %cst_16 = arith.constant dense<0.000000e+00> : vector<8x128xf32>
      %45 = vector.multi_reduction <add>, %44, %cst_16 [0] : vector<4x8x128xf32> to vector<8x128xf32>
      %46 = arith.addf %43, %45 : vector<8x128xf32>
      %c0_17 = arith.constant 0 : index
      %c0_18 = arith.constant 0 : index
      %47 = vector.load %arg5[%c0_17, %c0_18] : memref<8x128xf32, #tpu.memory_space<vmem>>, vector<8x128xf32>
      tpu.vector_store %arg5[%c0_17, %c0_18], %46 {strides = array<i32>} : memref<8x128xf32, #tpu.memory_space<vmem>>, vector<8x128xf32>,
      %c0_19 = arith.constant 0 : index
      %c0_20 = arith.constant 0 : index
      %48 = vector.load %arg6[%c0_19, %c0_20] : memref<8x128xf32, #tpu.memory_space<vmem>>, vector<8x128xf32>
      %49 = vector.shape_cast %42 : vector<32x128xf32> to vector<4x8x128xf32>
      %cst_21 = arith.constant dense<0.000000e+00> : vector<8x128xf32>
      %50 = vector.multi_reduction <add>, %49, %cst_21 [0] : vector<4x8x128xf32> to vector<8x128xf32>
      %51 = arith.addf %48, %50 : vector<8x128xf32>
      %c0_22 = arith.constant 0 : index
      %c0_23 = arith.constant 0 : index
      %52 = vector.load %arg6[%c0_22, %c0_23] : memref<8x128xf32, #tpu.memory_space<vmem>>, vector<8x128xf32>
      tpu.vector_store %arg6[%c0_22, %c0_23], %51 {strides = array<i32>} : memref<8x128xf32, #tpu.memory_space<vmem>>, vector<8x128xf32>,
      %c0_24 = arith.constant 0 : index
      %c0_25 = arith.constant 0 : index
      %53 = vector.load %arg7[%c0_24, %c0_25] : memref<8x128xf32, #tpu.memory_space<vmem>>, vector<8x128xf32>
      %54 = vector.shape_cast %30 : vector<32x128xf32> to vector<4x8x128xf32>
      %cst_26 = arith.constant dense<0.000000e+00> : vector<8x128xf32>
      %55 = vector.multi_reduction <add>, %54, %cst_26 [0] : vector<4x8x128xf32> to vector<8x128xf32>
      %56 = arith.addf %53, %55 : vector<8x128xf32>
      %c0_27 = arith.constant 0 : index
      %c0_28 = arith.constant 0 : index
      %57 = vector.load %arg7[%c0_27, %c0_28] : memref<8x128xf32, #tpu.memory_space<vmem>>, vector<8x128xf32>
      tpu.vector_store %arg7[%c0_27, %c0_28], %56 {strides = array<i32>} : memref<8x128xf32, #tpu.memory_space<vmem>>, vector<8x128xf32>,
    } else {
    }
    %c0_i32_5 = arith.constant 0 : i32
    %11 = arith.cmpi eq, %arg1, %c0_i32_5 : i32
    %12 = arith.extui %11 : i1 to i32
    %c0_i32_6 = arith.constant 0 : i32
    %13 = arith.cmpi ne, %12, %c0_i32_6 : i32
    scf.if %13 {
      %c0 = arith.constant 0 : index
      %c0_7 = arith.constant 0 : index
      %14 = vector.load %arg5[%c0, %c0_7] : memref<8x128xf32, #tpu.memory_space<vmem>>, vector<8x128xf32>
      %15 = vector.shape_cast %14 : vector<8x128xf32> to vector<1x8x128xf32>
      %cst = arith.constant dense<0.000000e+00> : vector<1xf32>
      %16 = vector.multi_reduction <add>, %15, %cst [1, 2] : vector<1x8x128xf32> to vector<1xf32>
      %17 = vector.shape_cast %16 : vector<1xf32> to vector<1x1x1xf32>
      %18 = vector.extract %17[0, 0, 0] : f32 from vector<1x1x1xf32>
      %19 = vector.broadcast %18 : f32 to vector<1x1xf32>
      %c0_8 = arith.constant 0 : index
      %c0_9 = arith.constant 0 : index
      %20 = vector.load %arg6[%c0_8, %c0_9] : memref<8x128xf32, #tpu.memory_space<vmem>>, vector<8x128xf32>
      %21 = vector.shape_cast %20 : vector<8x128xf32> to vector<1x8x128xf32>
      %cst_10 = arith.constant dense<0.000000e+00> : vector<1xf32>
      %22 = vector.multi_reduction <add>, %21, %cst_10 [1, 2] : vector<1x8x128xf32> to vector<1xf32>
      %23 = vector.shape_cast %22 : vector<1xf32> to vector<1x1x1xf32>
      %24 = vector.extract %23[0, 0, 0] : f32 from vector<1x1x1xf32>
      %25 = vector.broadcast %24 : f32 to vector<1x1xf32>
      %c0_11 = arith.constant 0 : index
      %c0_12 = arith.constant 0 : index
      %26 = vector.load %arg7[%c0_11, %c0_12] : memref<8x128xf32, #tpu.memory_space<vmem>>, vector<8x128xf32>
      %27 = vector.shape_cast %26 : vector<8x128xf32> to vector<1x8x128xf32>
      %cst_13 = arith.constant dense<0.000000e+00> : vector<1xf32>
      %28 = vector.multi_reduction <add>, %27, %cst_13 [1, 2] : vector<1x8x128xf32> to vector<1xf32>
      %29 = vector.shape_cast %28 : vector<1xf32> to vector<1x1x1xf32>
      %30 = vector.extract %29[0, 0, 0] : f32 from vector<1x1x1xf32>
      %31 = vector.broadcast %30 : f32 to vector<1x1xf32>
      %32 = tpu.iota {dimensions = array<i32: 1>} : vector<8x128xi32>
      %c0_i32_14 = arith.constant 0 : i32
      %33 = vector.broadcast %c0_i32_14 : i32 to vector<8x128xi32>
      %34 = arith.cmpi eq, %32, %33 : vector<8x128xi32>
      %cst_15 = arith.constant 0.000000e+00 : f32
      %35 = vector.shape_cast %19 : vector<1x1xf32> to vector<1x1xf32>
      %36 = vector.broadcast %35 : vector<1x1xf32> to vector<8x128xf32>
      %37 = vector.broadcast %cst_15 : f32 to vector<8x128xf32>
      %38 = arith.select %34, %36, %37 : vector<8x128xi1>, vector<8x128xf32>
      %c1_i32_16 = arith.constant 1 : i32
      %39 = vector.broadcast %c1_i32_16 : i32 to vector<8x128xi32>
      %40 = arith.cmpi eq, %32, %39 : vector<8x128xi32>
      %cst_17 = arith.constant 0.000000e+00 : f32
      %41 = vector.shape_cast %25 : vector<1x1xf32> to vector<1x1xf32>
      %42 = vector.broadcast %41 : vector<1x1xf32> to vector<8x128xf32>
      %43 = vector.broadcast %cst_17 : f32 to vector<8x128xf32>
      %44 = arith.select %40, %42, %43 : vector<8x128xi1>, vector<8x128xf32>
      %45 = arith.addf %38, %44 : vector<8x128xf32>
      %c2_i32 = arith.constant 2 : i32
      %46 = vector.broadcast %c2_i32 : i32 to vector<8x128xi32>
      %47 = arith.cmpi eq, %32, %46 : vector<8x128xi32>
      %cst_18 = arith.constant 0.000000e+00 : f32
      %48 = vector.shape_cast %31 : vector<1x1xf32> to vector<1x1xf32>
      %49 = vector.broadcast %48 : vector<1x1xf32> to vector<8x128xf32>
      %50 = vector.broadcast %cst_18 : f32 to vector<8x128xf32>
      %51 = arith.select %47, %49, %50 : vector<8x128xi1>, vector<8x128xf32>
      %52 = arith.addf %45, %51 : vector<8x128xf32>
      %c0_19 = arith.constant 0 : index
      %c0_20 = arith.constant 0 : index
      %c0_21 = arith.constant 0 : index
      %53 = vector.load %arg4[%c0_19, %c0_20, %c0_21] : memref<1x8x128xf32, #tpu.memory_space<vmem>>, vector<1x8x128xf32>
      %54 = vector.shape_cast %53 : vector<1x8x128xf32> to vector<8x128xf32>
      %55 = vector.shape_cast %52 : vector<8x128xf32> to vector<1x8x128xf32>
      tpu.vector_store %arg4[%c0_19, %c0_20, %c0_21], %55 {strides = array<i32>} : memref<1x8x128xf32, #tpu.memory_space<vmem>>, vector<1x8x128xf32>,
    } else {
    }
    return
  }
  func.func @transform_0(%arg0: i32, %arg1: i32) -> (i32, i32) {
    %c1_i32 = arith.constant 1 : i32
    %0 = arith.muli %arg0, %c1_i32 : i32
    %1 = arith.addi %0, %arg1 : i32
    %c0_i32 = arith.constant 0 : i32
    %2 = arith.minsi %1, %c0_i32 : i32
    %c0_i32_0 = arith.constant 0 : i32
    %c0_i32_1 = arith.constant 0 : i32
    return %2, %c0_i32_0 : i32, i32
  }
  func.func @transform_1(%arg0: i32, %arg1: i32) -> (i32, i32) {
    %c1_i32 = arith.constant 1 : i32
    %0 = arith.muli %arg0, %c1_i32 : i32
    %1 = arith.addi %0, %arg1 : i32
    %c0_i32 = arith.constant 0 : i32
    %2 = arith.minsi %1, %c0_i32 : i32
    %c0_i32_0 = arith.constant 0 : i32
    %c0_i32_1 = arith.constant 0 : i32
    return %2, %c0_i32_0 : i32, i32
  }
  func.func @transform_2(%arg0: i32, %arg1: i32) -> (i32, i32, i32) {
    %c0_i32 = arith.constant 0 : i32
    %c0_i32_0 = arith.constant 0 : i32
    %c0_i32_1 = arith.constant 0 : i32
    return %arg0, %c0_i32, %c0_i32_0 : i32, i32, i32
  }
}

</mosaic_0001>

<llo_original>
// kernel: tpu_custom_call.1
$region0: #{tpu_custom_call.1}
  #allocation0 [shape = 'u32[]', space=smem, size = 0x4, offset = 0x4, fixed_abs, tag = 'smem constant byte address 0x4 - core index']
  #allocation1 [shape = 'u32[144,128]{1,0:T(1,128)}', space=vmem, size = 0x12000, scoped, tag = 'internal scratch']
  #allocation2 [shape = 'f32[8,128]{1,0:T(8,128)}', space=vmem, size = 0x1000, scoped, tag = 'scratch operand']
  #allocation3 [shape = 'f32[8,128]{1,0:T(8,128)}', space=vmem, size = 0x1000, scoped, tag = 'scratch operand']
  #allocation4 [shape = 'f32[8,128]{1,0:T(8,128)}', space=vmem, size = 0x1000, scoped, tag = 'scratch operand']
  %s0 = inlined_call_operand.hbm [shape: f32[16,128], index: 0, kind: input, shape index: {}]
  %s1 = inlined_call_operand.hbm [shape: s8[16,128], index: 1, kind: input, shape index: {}]
  %s2 = inlined_call_operand.hbm [shape: f32[1,8,128], index: 2, kind: output, shape index: {}]
  %s3 = sld [smem:[#allocation0]]
  $region42: #{tpu_custom_call.1} parent=0
    _
  %s5 = ssub.s32 1, %s3
  %s6 = scalar_select 0, %s5, %s3
  $region1: #{tpu_custom_call.1} parent=0
    #allocation5 [shape = 'u8[16384]{0}', space=vmem, size = 0x4000, scoped, tag = 'input window, operand 0, single buffered']
    #allocation6 [shape = 's32[1]{0}', space=sflag, size = 0x4, scoped, tag = 'scoped memory for tpu_custom_call.1']
    #allocation7 [shape = 's32[1]{0}', space=sflag, size = 0x4, scoped, tag = 'scoped memory for tpu_custom_call.1']
    #allocation8 [shape = 'u8[4096]{0}', space=vmem, size = 0x1000, scoped, tag = 'input window, operand 1, single buffered']
    #allocation9 [shape = 's32[1]{0}', space=sflag, size = 0x4, scoped, tag = 'scoped memory for tpu_custom_call.1']
    #allocation10 [shape = 'u8[4096]{0}', space=vmem, size = 0x1000, scoped, tag = 'output window, operand 0, single buffered']
    %7 = vsyncpa [#allocation6], 0
    %8 = vsyncpa [#allocation9], 0
    %9 = vsyncpa [#allocation7], 0
    // Predicated region
    $region2: #{tpu_custom_call.1} parent=1 // pred_check
      _
    $region3: #{tpu_custom_call.1} parent=1 // pred_check_branch
      %11 = sbr.rel (0) target = $region5
    $region4: #{tpu_custom_call.1} parent=1 // pred_region
      %s12 = sadd.s32 0, 0
      %p13 = scmp.lt.s32.totalorder %s12, 0
      %s14 = scalar_select %p13, %s12, 0
      %s15 = smul.u32 4, %s14
      %s16 = ssub.s32 2, %s15
      %s17 = smul.u32 128, %s16
      %s19 = ssub.s32 512, %s17
      %20 = vsyncadd [#allocation6], %s19
      %p21 = scmp.ne.s32.totalorder 0, %s17
      %s22 = smul.addr %s15, 128
      %s23 = scalar_lea.hbm %s0, %s22
      %s24 = smul.u32 8, %s16
      %s25 = sshll.u32 [#allocation5], 4
      %s26 = int_to_ptr.vmem [resolvable:$true] %s25
      %s27 = sshll.u32 %s24, 4
      %31 = dma.hbm_to_vmem [thread:$0]  (%p21), %s23, %s27, %s26, [#allocation6], 128, 128, 8
    $region5: #{tpu_custom_call.1} parent=1 // pred_fallthru
      _
    // Predicated region
    $region6: #{tpu_custom_call.1} parent=1 // pred_check
      _
    $region7: #{tpu_custom_call.1} parent=1 // pred_check_branch
      %33 = sbr.rel (0) target = $region9
    $region8: #{tpu_custom_call.1} parent=1 // pred_region
      %s34 = sadd.s32 0, 0
      %p35 = scmp.lt.s32.totalorder %s34, 0
      %s36 = scalar_select %p35, %s34, 0
      %s37 = smul.u32 4, %s36
      %s38 = ssub.s32 2, %s37
      %s39 = smul.u32 32, %s38
      %s41 = ssub.s32 128, %s39
      %42 = vsyncadd [#allocation9], %s41
      %p43 = scmp.ne.s32.totalorder 0, %s39
      %s44 = smul.addr %s37, 32
      %s45 = scalar_lea.hbm %s1, %s44
      %s46 = smul.u32 2, %s38
      %s47 = sshll.u32 [#allocation8], 4
      %s48 = int_to_ptr.vmem [resolvable:$true] %s47
      %s49 = sshll.u32 %s46, 4
      %53 = dma.hbm_to_vmem [thread:$0]  (%p43), %s45, %s49, %s48, [#allocation9], 32, 32, 2
    $region9: #{tpu_custom_call.1} parent=1 // pred_fallthru
      _
    // Predicated region
    $region10: #{tpu_custom_call.1} parent=1 // pred_check
      _
    $region11: #{tpu_custom_call.1} parent=1 // pred_check_branch
      %55 = sbr.rel (0) target = $region13
    $region12: #{tpu_custom_call.1} parent=1 // pred_region
      %56 = dma.done [#allocation6], 512
    $region13: #{tpu_custom_call.1} parent=1 // pred_fallthru
      _
    // Predicated region
    $region14: #{tpu_custom_call.1} parent=1 // pred_check
      _
    $region15: #{tpu_custom_call.1} parent=1 // pred_check_branch
      %58 = sbr.rel (0) target = $region17
    $region16: #{tpu_custom_call.1} parent=1 // pred_region
      %59 = dma.done [#allocation9], 128
    $region17: #{tpu_custom_call.1} parent=1 // pred_fallthru
      _
    %s60 = sadd.s32 0, 0
    %p61 = scmp.lt.s32.totalorder %s60, 0
    %s62 = scalar_select %p61, %s60, 0
    %s63 = smul.u32 4, %s62
    %s64 = ssub.s32 2, %s63
    %s65 = smul.u32 128, %s64
    %s66 = sadd.s32 0, 0
    %p67 = scmp.lt.s32.totalorder %s66, 0
    %s68 = scalar_select %p67, %s66, 0
    %s69 = smul.u32 4, %s68
    %s70 = ssub.s32 2, %s69
    %s71 = smul.u32 32, %s70
    %p72 = scmp.eq.s32.totalorder 0, 0
    // Predicated region
    $region18: #{tpu_custom_call.1} parent=1 // pred_check
      %p73 = pneg %p72
    $region19: #{tpu_custom_call.1} parent=1 // pred_check_branch
      %75 = sbr.rel (%p73) target = $region21
    $region20: #{tpu_custom_call.1} parent=1 // pred_region
      %76 = vst [vmem:[#allocation2] sm:$0xff] 0.0
      %77 = vst [vmem:[#allocation3] sm:$0xff] 0.0
      %78 = vst [vmem:[#allocation4] sm:$0xff] 0.0
    $region21: #{tpu_custom_call.1} parent=1 // pred_fallthru
      _
    %s79 = sadd.s32 0, 0
    %p80 = scmp.lt.s32.totalorder %s79, 0
    // Predicated region
    $region22: #{tpu_custom_call.1} parent=1 // pred_check
      %p81 = pneg %p80
    $region23: #{tpu_custom_call.1} parent=1 // pred_check_branch
      %83 = sbr.rel (%p81) target = $region25
    $region24: #{tpu_custom_call.1} parent=1 // pred_region
      %v84 = vld [vmem:[#allocation5] sm:$0xff]
      %v85 = vld [vmem:[#allocation5 + $0x8] sm:$0xff]
      %v86 = vld [vmem:[#allocation5 + $0x10] sm:$0xff]
      %v87 = vld [vmem:[#allocation5 + $0x18] sm:$0xff]
      %v88 = vld [vmem:[#allocation8] sm:$0x3]
      %v89 = vld [vmem:[#allocation8 + $0x2] sm:$0x3]
      %v90 = vld [vmem:[#allocation8 + $0x4] sm:$0x3]
      %v91 = vld [vmem:[#allocation8 + $0x6] sm:$0x3]
      %v92 = vunpack.c.0.s8 %v88
      %v93 = vunpack.c.0.s8 %v89
      %v94 = vunpack.c.0.s8 %v90
      %v95 = vunpack.c.0.s8 %v91
      %v96 = vcvt.s32.f32 %v92
      %v97 = vcvt.s32.f32 %v93
      %v98 = vcvt.s32.f32 %v94
      %v99 = vcvt.s32.f32 %v95
      %v100 = vmax.f32 %v84, 0.0
      %v101 = vmax.f32 %v85, 0.0
      %v102 = vmax.f32 %v86, 0.0
      %v103 = vmax.f32 %v87, 0.0
      %v104 = vand.u32 2147483647, %v84
      %v105 = vand.u32 2147483647, %v85
      %v106 = vand.u32 2147483647, %v86
      %v107 = vand.u32 2147483647, %v87
      %v108 = vsub.f32 0.0, %v104
      %v109 = vsub.f32 0.0, %v105
      %v110 = vsub.f32 0.0, %v106
      %v111 = vsub.f32 0.0, %v107
      %v112 = vmul.f32 %v108, 1.442695
      %v113 = vpow.pop %v112
      %v114 = vmul.f32 %v109, 1.442695
      %v115 = vpow.pop %v114
      %v116 = vmul.f32 %v110, 1.442695
      %v117 = vpow.pop %v116
      %v118 = vmul.f32 %v111, 1.442695
      %v119 = vpow.pop %v118
      %v120 = vadd.f32 %v113, 1.0
      %v121 = vlog2.pop %v120
      %v122 = vmul.f32 %v121, 0.6931472
      %v123 = vmul.f32 -0.5, %v113
      %v124 = vadd.f32 %v123, 1.0
      %v125 = vmul.f32 %v124, %v113
      %v126 = vand.u32 2147483647, %v113
      %vm127 = vcmp.lt.f32.partialorder %v126, 0.0004427343
      %v128 = vsel %vm127, %v125, %v122
      %v129 = vadd.f32 %v115, 1.0
      %v130 = vlog2.pop %v129
      %v131 = vmul.f32 %v130, 0.6931472
      %v132 = vmul.f32 -0.5, %v115
      %v133 = vadd.f32 %v132, 1.0
      %v134 = vmul.f32 %v133, %v115
      %v135 = vand.u32 2147483647, %v115
      %vm136 = vcmp.lt.f32.partialorder %v135, 0.0004427343
      %v137 = vsel %vm136, %v134, %v131
      %v138 = vadd.f32 %v117, 1.0
      %v139 = vlog2.pop %v138
      %v140 = vmul.f32 %v139, 0.6931472
      %v141 = vmul.f32 -0.5, %v117
      %v142 = vadd.f32 %v141, 1.0
      %v143 = vmul.f32 %v142, %v117
      %v144 = vand.u32 2147483647, %v117
      %vm145 = vcmp.lt.f32.partialorder %v144, 0.0004427343
      %v146 = vsel %vm145, %v143, %v140
      %v147 = vadd.f32 %v119, 1.0
      %v148 = vlog2.pop %v147
      %v149 = vmul.f32 %v148, 0.6931472
      %v150 = vmul.f32 -0.5, %v119
      %v151 = vadd.f32 %v150, 1.0
      %v152 = vmul.f32 %v151, %v119
      %v153 = vand.u32 2147483647, %v119
      %vm154 = vcmp.lt.f32.partialorder %v153, 0.0004427343
      %v155 = vsel %vm154, %v152, %v149
      %v156 = vadd.f32 %v100, %v128
      %v157 = vadd.f32 %v101, %v137
      %v158 = vadd.f32 %v102, %v146
      %v159 = vadd.f32 %v103, %v155
      %v160 = vsub.f32 1.0, %v96
      %v161 = vsub.f32 1.0, %v97
      %v162 = vsub.f32 1.0, %v98
      %v163 = vsub.f32 1.0, %v99
      %v164 = vmul.f32 %v160, %v156
      %v165 = vmul.f32 %v161, %v157
      %v166 = vmul.f32 %v162, %v158
      %v167 = vmul.f32 %v163, %v159
      %v168 = vsub.f32 %v156, %v84
      %v169 = vsub.f32 %v157, %v85
      %v170 = vsub.f32 %v158, %v86
      %v171 = vsub.f32 %v159, %v87
      %v172 = vmul.f32 %v96, %v168
      %v173 = vmul.f32 %v97, %v169
      %v174 = vmul.f32 %v98, %v170
      %v175 = vmul.f32 %v99, %v171
      %v176 = vld [vmem:[#allocation2] sm:$0xff]
      %v177 = vadd.f32 %v164, %v165
      %v178 = vadd.f32 %v177, %v166
      %v179 = vadd.f32 %v178, %v167
      %v180 = vadd.f32 %v176, %v179
      %181 = vst [vmem:[#allocation2] sm:$0xff] %v180
      %v182 = vld [vmem:[#allocation3] sm:$0xff]
      %v183 = vadd.f32 %v172, %v173
      %v184 = vadd.f32 %v183, %v174
      %v185 = vadd.f32 %v184, %v175
      %v186 = vadd.f32 %v182, %v185
      %187 = vst [vmem:[#allocation3] sm:$0xff] %v186
      %v188 = vld [vmem:[#allocation4] sm:$0xff]
      %v189 = vadd.f32 %v96, %v97
      %v190 = vadd.f32 %v189, %v98
      %v191 = vadd.f32 %v190, %v99
      %v192 = vadd.f32 %v188, %v191
      %193 = vst [vmem:[#allocation4] sm:$0xff] %v192
    $region25: #{tpu_custom_call.1} parent=1 // pred_fallthru
      _
    %p194 = scmp.ge.s32.totalorder %s79, 0
    // Predicated region
    $region26: #{tpu_custom_call.1} parent=1 // pred_check
      %p195 = pneg %p194
    $region27: #{tpu_custom_call.1} parent=1 // pred_check_branch
      %197 = sbr.rel (%p195) target = $region29
    $region28: #{tpu_custom_call.1} parent=1 // pred_region
      %p198 = scmp.eq.s32.totalorder %s79, 0
      %s199 = scalar_select %p198, 2048, 0
      %v200 = vlaneseq
      %v201 = vshrl.u32 %v200, 7
      %v202 = vadd.s32 %v201, 8
      %v203 = vadd.s32 %v201, 16
      %v204 = vadd.s32 %v201, 24
      %v205 = vlaneseq
      %v206 = vand.u32 %v205, 127
      %v207 = vmul.u32 %v201, 128
      %v208 = vmul.u32 %v202, 128
      %v209 = vmul.u32 %v203, 128
      %v210 = vmul.u32 %v204, 128
      %v211 = vadd.s32 %v207, %v206
      %v212 = vadd.s32 %v208, %v206
      %v213 = vadd.s32 %v209, %v206
      %v214 = vadd.s32 %v210, %v206
      %v215 = vstv %s199
      %vm216 = vcmp.lt.s32.totalorder %v211, %v215
      %vm217 = vcmp.lt.s32.totalorder %v212, %v215
      %vm218 = vcmp.lt.s32.totalorder %v213, %v215
      %vm219 = vcmp.lt.s32.totalorder %v214, %v215
      %v220 = vsel %vm216, 1, 0
      %v221 = vsel %vm217, 1, 0
      %v222 = vsel %vm218, 1, 0
      %v223 = vsel %vm219, 1, 0
      %v224 = vcvt.s32.f32 %v220
      %v225 = vcvt.s32.f32 %v221
      %v226 = vcvt.s32.f32 %v222
      %v227 = vcvt.s32.f32 %v223
      %v228 = vld [vmem:[#allocation5] sm:$0xff]
      %v229 = vld [vmem:[#allocation5 + $0x8] sm:$0xff]
      %v230 = vld [vmem:[#allocation5 + $0x10] sm:$0xff]
      %v231 = vld [vmem:[#allocation5 + $0x18] sm:$0xff]
      %v232 = vsel %vm216, %v228, 0.0
      %v233 = vsel %vm217, %v229, 0.0
      %v234 = vsel %vm218, %v230, 0.0
      %v235 = vsel %vm219, %v231, 0.0
      %v236 = vld [vmem:[#allocation8] sm:$0x3]
      %v237 = vld [vmem:[#allocation8 + $0x2] sm:$0x3]
      %v238 = vld [vmem:[#allocation8 + $0x4] sm:$0x3]
      %v239 = vld [vmem:[#allocation8 + $0x6] sm:$0x3]
      %v240 = vunpack.c.0.s8 %v236
      %v241 = vunpack.c.0.s8 %v237
      %v242 = vunpack.c.0.s8 %v238
      %v243 = vunpack.c.0.s8 %v239
      %v244 = vcvt.s32.f32 %v240
      %v245 = vcvt.s32.f32 %v241
      %v246 = vcvt.s32.f32 %v242
      %v247 = vcvt.s32.f32 %v243
      %v248 = vmul.f32 %v244, %v224
      %v249 = vmul.f32 %v245, %v225
      %v250 = vmul.f32 %v246, %v226
      %v251 = vmul.f32 %v247, %v227
      %v252 = vsub.f32 %v224, %v248
      %v253 = vsub.f32 %v225, %v249
      %v254 = vsub.f32 %v226, %v250
      %v255 = vsub.f32 %v227, %v251
      %v256 = vmax.f32 %v232, 0.0
      %v257 = vmax.f32 %v233, 0.0
      %v258 = vmax.f32 %v234, 0.0
      %v259 = vmax.f32 %v235, 0.0
      %v260 = vand.u32 2147483647, %v232
      %v261 = vand.u32 2147483647, %v233
      %v262 = vand.u32 2147483647, %v234
      %v263 = vand.u32 2147483647, %v235
      %v264 = vsub.f32 0.0, %v260
      %v265 = vsub.f32 0.0, %v261
      %v266 = vsub.f32 0.0, %v262
      %v267 = vsub.f32 0.0, %v263
      %v268 = vmul.f32 %v264, 1.442695
      %v269 = vpow.pop %v268
      %v270 = vmul.f32 %v265, 1.442695
      %v271 = vpow.pop %v270
      %v272 = vmul.f32 %v266, 1.442695
      %v273 = vpow.pop %v272
      %v274 = vmul.f32 %v267, 1.442695
      %v275 = vpow.pop %v274
      %v276 = vadd.f32 %v269, 1.0
      %v277 = vlog2.pop %v276
      %v278 = vmul.f32 %v277, 0.6931472
      %v279 = vmul.f32 -0.5, %v269
      %v280 = vadd.f32 %v279, 1.0
      %v281 = vmul.f32 %v280, %v269
      %v282 = vand.u32 2147483647, %v269
      %vm283 = vcmp.lt.f32.partialorder %v282, 0.0004427343
      %v284 = vsel %vm283, %v281, %v278
      %v285 = vadd.f32 %v271, 1.0
      %v286 = vlog2.pop %v285
      %v287 = vmul.f32 %v286, 0.6931472
      %v288 = vmul.f32 -0.5, %v271
      %v289 = vadd.f32 %v288, 1.0
      %v290 = vmul.f32 %v289, %v271
      %v291 = vand.u32 2147483647, %v271
      %vm292 = vcmp.lt.f32.partialorder %v291, 0.0004427343
      %v293 = vsel %vm292, %v290, %v287
      %v294 = vadd.f32 %v273, 1.0
      %v295 = vlog2.pop %v294
      %v296 = vmul.f32 %v295, 0.6931472
      %v297 = vmul.f32 -0.5, %v273
      %v298 = vadd.f32 %v297, 1.0
      %v299 = vmul.f32 %v298, %v273
      %v300 = vand.u32 2147483647, %v273
      %vm301 = vcmp.lt.f32.partialorder %v300, 0.0004427343
      %v302 = vsel %vm301, %v299, %v296
      %v303 = vadd.f32 %v275, 1.0
      %v304 = vlog2.pop %v303
      %v305 = vmul.f32 %v304, 0.6931472
      %v306 = vmul.f32 -0.5, %v275
      %v307 = vadd.f32 %v306, 1.0
      %v308 = vmul.f32 %v307, %v275
      %v309 = vand.u32 2147483647, %v275
      %vm310 = vcmp.lt.f32.partialorder %v309, 0.0004427343
      %v311 = vsel %vm310, %v308, %v305
      %v312 = vadd.f32 %v256, %v284
      %v313 = vadd.f32 %v257, %v293
      %v314 = vadd.f32 %v258, %v302
      %v315 = vadd.f32 %v259, %v311
      %v316 = vmul.f32 %v252, %v312
      %v317 = vmul.f32 %v253, %v313
      %v318 = vmul.f32 %v254, %v314
      %v319 = vmul.f32 %v255, %v315
      %v320 = vsub.f32 %v312, %v232
      %v321 = vsub.f32 %v313, %v233
      %v322 = vsub.f32 %v314, %v234
      %v323 = vsub.f32 %v315, %v235
      %v324 = vmul.f32 %v248, %v320
      %v325 = vmul.f32 %v249, %v321
      %v326 = vmul.f32 %v250, %v322
      %v327 = vmul.f32 %v251, %v323
      %v328 = vld [vmem:[#allocation2] sm:$0xff]
      %v329 = vadd.f32 %v316, %v317
      %v330 = vadd.f32 %v329, %v318
      %v331 = vadd.f32 %v330, %v319
      %v332 = vadd.f32 %v328, %v331
      %333 = vst [vmem:[#allocation2] sm:$0xff] %v332
      %v334 = vld [vmem:[#allocation3] sm:$0xff]
      %v335 = vadd.f32 %v324, %v325
      %v336 = vadd.f32 %v335, %v326
      %v337 = vadd.f32 %v336, %v327
      %v338 = vadd.f32 %v334, %v337
      %339 = vst [vmem:[#allocation3] sm:$0xff] %v338
      %v340 = vld [vmem:[#allocation4] sm:$0xff]
      %v341 = vadd.f32 %v248, %v249
      %v342 = vadd.f32 %v341, %v250
      %v343 = vadd.f32 %v342, %v251
      %v344 = vadd.f32 %v340, %v343
      %345 = vst [vmem:[#allocation4] sm:$0xff] %v344
    $region29: #{tpu_custom_call.1} parent=1 // pred_fallthru
      _
    // Predicated region
    $region30: #{tpu_custom_call.1} parent=1 // pred_check
      %p346 = pneg %p72
    $region31: #{tpu_custom_call.1} parent=1 // pred_check_branch
      %348 = sbr.rel (%p346) target = $region33
    $region32: #{tpu_custom_call.1} parent=1 // pred_region
      %v349 = vld [vmem:[#allocation2] sm:$0xff]
      %350 = vadd.xlane.f32.xlu0 %v349
      %v351 = vpop.xlane.xlu0 %350
      %v352 = vrot.slane %v351, 4
      %v353 = vadd.f32 %v351, %v352
      %v354 = vrot.slane %v353, 2
      %v355 = vadd.f32 %v353, %v354
      %v356 = vrot.slane %v355, 1
      %v357 = vadd.f32 %v355, %v356
      %s358 = vtos %v357
      %v359 = vld [vmem:[#allocation3] sm:$0xff]
      %360 = vadd.xlane.f32.xlu0 %v359
      %v361 = vpop.xlane.xlu0 %360
      %v362 = vrot.slane %v361, 4
      %v363 = vadd.f32 %v361, %v362
      %v364 = vrot.slane %v363, 2
      %v365 = vadd.f32 %v363, %v364
      %v366 = vrot.slane %v365, 1
      %v367 = vadd.f32 %v365, %v366
      %s368 = vtos %v367
      %v369 = vld [vmem:[#allocation4] sm:$0xff]
      %370 = vadd.xlane.f32.xlu0 %v369
      %v371 = vpop.xlane.xlu0 %370
      %v372 = vrot.slane %v371, 4
      %v373 = vadd.f32 %v371, %v372
      %v374 = vrot.slane %v373, 2
      %v375 = vadd.f32 %v373, %v374
      %v376 = vrot.slane %v375, 1
      %v377 = vadd.f32 %v375, %v376
      %s378 = vtos %v377
      %v379 = vlaneseq
      %v380 = vand.u32 %v379, 127
      %vm381 = vcmp.eq.s32.totalorder %v380, 0
      %v382 = vstv %s358
      %v383 = vsel %vm381, %v382, 0.0
      %vm384 = vcmp.eq.s32.totalorder %v380, 1
      %v385 = vstv %s368
      %v386 = vsel %vm384, %v385, 0.0
      %v387 = vadd.f32 %v383, %v386
      %vm388 = vcmp.eq.s32.totalorder %v380, 2
      %v389 = vstv %s378
      %v390 = vsel %vm388, %v389, 0.0
      %v391 = vadd.f32 %v387, %v390
      %392 = vst [vmem:[#allocation10] sm:$0xff] %v391
    $region33: #{tpu_custom_call.1} parent=1 // pred_fallthru
      _
    // Predicated region
    $region34: #{tpu_custom_call.1} parent=1 // pred_check
      _
    $region35: #{tpu_custom_call.1} parent=1 // pred_check_branch
      %394 = sbr.rel (0) target = $region37
    $region36: #{tpu_custom_call.1} parent=1 // pred_region
      %s396 = ssub.s32 128, 128
      %397 = vsyncadd [#allocation7], %s396
      %s399 = sshll.u32 [#allocation10], 4
      %s400 = int_to_ptr.vmem [resolvable:$true] %s399
      %402 = dma.vmem_to_hbm [thread:$0]  %s400, 128, %s2, [#allocation7]
    $region37: #{tpu_custom_call.1} parent=1 // pred_fallthru
      _
    // Predicated region
    $region38: #{tpu_custom_call.1} parent=1 // pred_check
      _
    $region39: #{tpu_custom_call.1} parent=1 // pred_check_branch
      %404 = sbr.rel (0) target = $region41
    $region40: #{tpu_custom_call.1} parent=1 // pred_region
      %405 = dma.done [#allocation7], 128
    $region41: #{tpu_custom_call.1} parent=1 // pred_fallthru
      _
    %406 = vsyncpa [#allocation6], 1
    %407 = vsyncpa [#allocation9], 1
    %408 = vsyncpa [#allocation7], 1

</llo_original>
